<compile_context>
chip_gen: v5e
topology: v5e:2x2
jax: 0.10.0
libtpu: 0.0.40
codegen_flags: <defaults>
</compile_context>

<pallas_src>
import jax
import jax.numpy as jnp
from jax.experimental import pallas as pl
from jax.experimental.pallas import tpu as pltpu


# ---------------------------------------------------------------------------
# Wrapper + Pallas kernel: full Agent.forward hot path
#   3 lane-dense MXU matmuls + lane-aligned VPU/XLU critic head, packed output
# ---------------------------------------------------------------------------
def agent_forward(state, latent, slab, layout):
    """Runs Agent.forward(state, latent) with pre-packed parameters.

    Returns (value (B,1), hidden_actor (B,H1))."""
    B = state.shape[0]
    SD, LD = layout["SD"], layout["LD"]
    H1, LANES = layout["H1"], layout["lanes"]
    r_ws, r_wl = layout["r_ws"], layout["r_wl"]
    r_w0, r_w1 = layout["r_w0"], layout["r_w1"]
    r_be, r_b0, r_b1 = layout["r_be"], layout["r_b0"], layout["r_b1"]
    r_wcl, r_bcl = layout["r_wcl"], layout["r_bcl"]

    if state.dtype != jnp.float32:
        state = state.astype(jnp.float32)
    if latent.dtype != jnp.float32:
        latent = latent.astype(jnp.float32)

    def kernel(s_ref, l_ref, w_ref, out_ref):
        f32 = jnp.float32

        def bias(row):
            # Bias rows are replicated across 8 sublanes at pack time; at B == 8
            # this is an aligned (8,128) load with no broadcast. Otherwise fall
            # back to a (1,128) row that jnp broadcasting expands.
            if B == 8:
                return w_ref[row:row + 8, :]
            return w_ref[row:row + 1, :]

        # encoders (RMS normalisation folded into the weight rows / bias row);
        # emb lanes 64:128 are tanh(0) == 0 by construction of the slab.
        emb = jnp.tanh(
            jnp.dot(s_ref[...], w_ref[r_ws:r_ws + SD, :], preferred_element_type=f32)
            + jnp.dot(l_ref[...], w_ref[r_wl:r_wl + LD, :], preferred_element_type=f32)
            + bias(r_be))

        # fused actor|critic layer 0 (128-lane dense output)
        h0 = jnp.tanh(
            jnp.dot(emb, w_ref[r_w0:r_w0 + LANES, :], preferred_element_type=f32)
            + bias(r_b0))

        # fused (block-diagonal) actor|critic layer 1: exactly one 128x128 tile
        h1 = jnp.tanh(
            jnp.dot(h0, w_ref[r_w1:r_w1 + LANES, :], preferred_element_type=f32)
            + bias(r_b1))

        # critic head: wcl lives in lanes H1:128 of its row -> lane-aligned with
        # the critic half of h1; actor lanes multiply zeros (free). Full-128 reduce.
        value = jnp.sum(h1 * bias(r_wcl), axis=-1, keepdims=True)   # (B,1), no bcl yet

        # packed lane-dense output: lanes 0:H1 = actor, lanes H1:128 = value;
        # the head bias row adds bcl only on the value lanes.
        lane = jax.lax.broadcasted_iota(jnp.int32, h1.shape, 1)
        out_ref[...] = jnp.where(lane < H1, h1, value) + bias(r_bcl)

    n_rows = slab.shape[0]
    flops = 2 * B * (SD * LANES + LD * LANES + 2 * LANES * LANES + LANES)
    bytes_accessed = (n_rows * LANES + B * (SD + LD + LANES)) * 4
    transcendentals = 3 * B * LANES

    packed_out = pl.pallas_call(
        kernel,
        out_shape=jax.ShapeDtypeStruct((B, LANES), jnp.float32),
        in_specs=[pl.BlockSpec(memory_space=pltpu.MemorySpace.VMEM)] * 3,
        out_specs=pl.BlockSpec(memory_space=pltpu.MemorySpace.VMEM),
        cost_estimate=pl.CostEstimate(
            flops=flops,
            transcendentals=transcendentals,
            bytes_accessed=bytes_accessed),
    )(state, latent, slab)

    value = packed_out[:, H1:H1 + 1]
    hidden_actor = packed_out[:, :H1]
    return value, hidden_actor


# ---------------------------------------------------------------------------
# Parameter construction (mirrors normc / constant-0 init)
# ---------------------------------------------------------------------------
def init_normc(key, fan_in, fan_out, gain=1.0):
    """PyTorch init_normc_: N(0,1) then scale by gain / sqrt(sum over input dim).

    PyTorch weight is (out, in) with sum over axis=1; we store (in, out), so the
    normalisation sums over axis=0 (the input dim)."""
    w = jax.random.normal(key, (fan_in, fan_out), dtype=jnp.float32)
    w = w * gain / jnp.sqrt(jnp.sum(w * w, axis=0, keepdims=True))
    return w


def make_params(key, state_dim, latent_dim, state_emb, latent_emb, hidden_layers):
    keys = jax.random.split(key, 10)
    gain_tanh = 5.0 / 3.0  # nn.init.calculate_gain('tanh')
    concat_dim = state_emb + latent_emb
    h0, h1 = hidden_layers

    params = {
        # RunningMeanStd stats (nontrivial here to exercise the norm fold)
        "s_mean": 0.1 * jax.random.normal(keys[7], (1, state_dim), jnp.float32),
        "s_var": 1.0 + 0.1 * jax.random.uniform(keys[8], (1, state_dim), jnp.float32),
        "l_mean": 0.1 * jax.random.normal(keys[9], (1, latent_dim), jnp.float32),
        "l_var": 1.0 + 0.1 * jax.random.uniform(keys[7], (1, latent_dim), jnp.float32),
        # feature extractors (deterministic normc init; biases 0)
        "w_se": init_normc(keys[0], state_dim, state_emb),
        "b_se": jnp.zeros((1, state_emb), jnp.float32),
        "w_le": init_normc(keys[1], latent_dim, latent_emb),
        "b_le": jnp.zeros((1, latent_emb), jnp.float32),
        # actor
        "wa0": init_normc(keys[2], concat_dim, h0, gain_tanh),
        "ba0": jnp.zeros((1, h0), jnp.float32),
        "wa1": init_normc(keys[3], h0, h1, gain_tanh),
        "ba1": jnp.zeros((1, h1), jnp.float32),
        # critic
        "wc0": init_normc(keys[4], concat_dim, h0, gain_tanh),
        "bc0": jnp.zeros((1, h0), jnp.float32),
        "wc1": init_normc(keys[5], h0, h1, gain_tanh),
        "bc1": jnp.zeros((1, h1), jnp.float32),
        # critic head
        "wcl": init_normc(keys[6], h1, 1),
        "bcl": jnp.zeros((1, 1), jnp.float32),
    }
    return params


# ---------------------------------------------------------------------------
# One-time (per training update) packing of the raw params into a single
# (rows, 128) f32 megaslab + the static row layout used by the kernel.
# ---------------------------------------------------------------------------
def pack_params(p):
    SD, SE = p["w_se"].shape
    LD, LE = p["w_le"].shape
    ENC = SE + LE
    H0 = p["wa0"].shape[1]
    H1 = p["wa1"].shape[1]
    N0, N1 = 2 * H0, 2 * H1
    LANES = 128
    # this packing layout assumes the standard varibad config (64|64 hidden,
    # 32+32 embeddings) so each fused layer exactly fills a 128-lane tile
    assert ENC <= LANES and N0 == LANES and N1 == LANES

    def rup8(n):
        return ((n + 7) // 8) * 8

    r_ws = 0
    r_wl = rup8(SD)
    r_w0 = r_wl + rup8(LD)
    r_w1 = r_w0 + LANES            # layer-0 weight has 128 rows (emb lane-padded)
    r_be = r_w1 + LANES
    r_b0 = r_be + 8
    r_b1 = r_b0 + 8
    r_wcl = r_b1 + 8
    r_bcl = r_wcl + 8
    n_rows = r_bcl + 8

    # fold the RMS normalisation into the encoder weights / biases
    inv_s = 1.0 / jnp.sqrt(p["s_var"] + 1e-8)          # (1, SD)
    inv_l = 1.0 / jnp.sqrt(p["l_var"] + 1e-8)          # (1, LD)
    ws = p["w_se"] * inv_s.T                           # (SD, SE), row-scaled
    wl = p["w_le"] * inv_l.T                           # (LD, LE), row-scaled
    b_se_fold = p["b_se"] - p["s_mean"] @ ws           # (1, SE)
    b_le_fold = p["b_le"] - p["l_mean"] @ wl           # (1, LE)

    slab = jnp.zeros((n_rows, LANES), jnp.float32)
    # encoder (block-diagonal across lanes 0:SE / SE:ENC; lanes ENC:128 stay 0)
    slab = slab.at[r_ws:r_ws + SD, 0:SE].set(ws)
    slab = slab.at[r_wl:r_wl + LD, SE:ENC].set(wl)
    # fused actor|critic layer 0 (rows beyond ENC stay 0 -> padded emb lanes)
    slab = slab.at[r_w0:r_w0 + ENC, 0:H0].set(p["wa0"])
    slab = slab.at[r_w0:r_w0 + ENC, H0:N0].set(p["wc0"])
    # fused actor|critic layer 1 (block-diagonal)
    slab = slab.at[r_w1:r_w1 + H0, 0:H1].set(p["wa1"])
    slab = slab.at[r_w1 + H0:r_w1 + 2 * H0, H1:N1].set(p["wc1"])
    # bias rows, each replicated across 8 sublanes
    b_enc = jnp.concatenate([b_se_fold, b_le_fold], axis=-1)          # (1, ENC)
    slab = slab.at[r_be:r_be + 8, 0:ENC].set(jnp.broadcast_to(b_enc, (8, ENC)))
    b0 = jnp.concatenate([p["ba0"], p["bc0"]], axis=-1)               # (1, N0)
    slab = slab.at[r_b0:r_b0 + 8, 0:N0].set(jnp.broadcast_to(b0, (8, N0)))
    b1 = jnp.concatenate([p["ba1"], p["bc1"]], axis=-1)               # (1, N1)
    slab = slab.at[r_b1:r_b1 + 8, 0:N1].set(jnp.broadcast_to(b1, (8, N1)))
    # critic head weights, lane-aligned with the critic half of h1 (lanes H1:128)
    wcl_row = p["wcl"][:, 0][None, :]                                 # (1, H1)
    slab = slab.at[r_wcl:r_wcl + 8, H1:N1].set(jnp.broadcast_to(wcl_row, (8, H1)))
    # critic head bias on the value lanes only
    slab = slab.at[r_bcl:r_bcl + 8, H1:N1].set(p["bcl"][0, 0])

    layout = dict(SD=SD, LD=LD, H1=H1, lanes=LANES,
                  r_ws=r_ws, r_wl=r_wl, r_w0=r_w0, r_w1=r_w1,
                  r_be=r_be, r_b0=r_b0, r_b1=r_b1, r_wcl=r_wcl, r_bcl=r_bcl)
    return slab, layout


# ---------------------------------------------------------------------------
# Pure-JAX reference (unfused, mirrors the PyTorch forward) for verification
# ---------------------------------------------------------------------------
def agent_forward_ref(state, latent, p):
    s = (state - p["s_mean"]) / jnp.sqrt(p["s_var"] + 1e-8)
    se = jnp.tanh(s @ p["w_se"] + p["b_se"])
    l = (latent - p["l_mean"]) / jnp.sqrt(p["l_var"] + 1e-8)
    le = jnp.tanh(l @ p["w_le"] + p["b_le"])
    x = jnp.concatenate([se, le], axis=-1)
    ha = jnp.tanh(x @ p["wa0"] + p["ba0"])
    ha = jnp.tanh(ha @ p["wa1"] + p["ba1"])
    hc = jnp.tanh(x @ p["wc0"] + p["bc0"])
    hc = jnp.tanh(hc @ p["wc1"] + p["bc1"])
    value = hc @ p["wcl"] + p["bcl"]
    return value, ha


if __name__ == "__main__":
    # small shapes consistent with Agent.forward
    B = 8            # batch (num envs)
    STATE_DIM = 16   # args.state_dim
    LATENT_DIM = 12  # args.latent_dim
    STATE_EMB = 32   # args.policy_state_embedding_dim
    LATENT_EMB = 32  # args.policy_latent_embedding_dim
    HIDDEN = (64, 64)

    key = jax.random.PRNGKey(0)
    k_state, k_latent, k_params = jax.random.split(key, 3)

    state = jax.random.normal(k_state, (B, STATE_DIM), dtype=jnp.float32)
    latent = jax.random.normal(k_latent, (B, LATENT_DIM), dtype=jnp.float32)
    params = make_params(k_params, STATE_DIM, LATENT_DIM, STATE_EMB, LATENT_EMB, HIDDEN)
    slab, layout = pack_params(params)

    value, hidden_actor = agent_forward(state, latent, slab, layout)
    jax.block_until_ready((value, hidden_actor))

    value_ref, actor_ref = agent_forward_ref(state, latent, params)
    assert value.shape == (B, 1) and hidden_actor.shape == (B, HIDDEN[-1])
    # tolerance loosened slightly vs 1e-5: folding the RMS normalisation into the
    # encoder weights reassociates the f32 arithmetic (values are O(1)).
    assert jnp.allclose(value, value_ref, atol=1e-4, rtol=1e-4)
    assert jnp.allclose(hidden_actor, actor_ref, atol=1e-4, rtol=1e-4)

    print("KERNEL_OK")
</pallas_src>

<mosaic_0001>
module attributes {stable_mosaic.version = 11 : i64} {
  func.func @kernel(%arg0: memref<8x16xf32, #tpu.memory_space<vmem>>, %arg1: memref<8x12xf32, #tpu.memory_space<vmem>>, %arg2: memref<328x128xf32, #tpu.memory_space<vmem>>, %arg3: memref<8x128xf32, #tpu.memory_space<vmem>>) attributes {dimension_semantics = [], scalar_prefetch = 0 : i64, scratch_operands = 0 : i64, tpu.core_type = #tpu.core_type<tc>} {
    %c0 = arith.constant 0 : index
    %c0_0 = arith.constant 0 : index
    %0 = vector.load %arg0[%c0, %c0_0] : memref<8x16xf32, #tpu.memory_space<vmem>>, vector<8x16xf32>
    %c0_1 = arith.constant 0 : index
    %c0_2 = arith.constant 0 : index
    %1 = vector.load %arg2[%c0_1, %c0_2] : memref<328x128xf32, #tpu.memory_space<vmem>>, vector<16x128xf32>
    %cst = arith.constant dense<0.000000e+00> : vector<8x128xf32>
    %2 = tpu.matmul %0, %1, %cst {dimension_numbers = #tpu.dot_dimension_numbers<[1], [0], [0], [1], [0, 0, 1, 1], [], []>} : vector<8x16xf32>, vector<16x128xf32>, vector<8x128xf32> -> vector<8x128xf32>
    %c0_3 = arith.constant 0 : index
    %c0_4 = arith.constant 0 : index
    %3 = vector.load %arg1[%c0_3, %c0_4] : memref<8x12xf32, #tpu.memory_space<vmem>>, vector<8x12xf32>
    %c16 = arith.constant 16 : index
    %c0_5 = arith.constant 0 : index
    %4 = vector.load %arg2[%c16, %c0_5] : memref<328x128xf32, #tpu.memory_space<vmem>>, vector<12x128xf32>
    %cst_6 = arith.constant dense<0.000000e+00> : vector<8x128xf32>
    %5 = tpu.matmul %3, %4, %cst_6 {dimension_numbers = #tpu.dot_dimension_numbers<[1], [0], [0], [1], [0, 0, 1, 1], [], []>} : vector<8x12xf32>, vector<12x128xf32>, vector<8x128xf32> -> vector<8x128xf32>
    %6 = arith.addf %2, %5 : vector<8x128xf32>
    %c288 = arith.constant 288 : index
    %c0_7 = arith.constant 0 : index
    %7 = vector.load %arg2[%c288, %c0_7] : memref<328x128xf32, #tpu.memory_space<vmem>>, vector<8x128xf32>
    %8 = arith.addf %6, %7 : vector<8x128xf32>
    %9 = math.tanh %8 : vector<8x128xf32>
    %c32 = arith.constant 32 : index
    %c0_8 = arith.constant 0 : index
    %10 = vector.load %arg2[%c32, %c0_8] : memref<328x128xf32, #tpu.memory_space<vmem>>, vector<128x128xf32>
    %cst_9 = arith.constant dense<0.000000e+00> : vector<8x128xf32>
    %11 = tpu.matmul %9, %10, %cst_9 {dimension_numbers = #tpu.dot_dimension_numbers<[1], [0], [0], [1], [0, 0, 1, 1], [], []>} : vector<8x128xf32>, vector<128x128xf32>, vector<8x128xf32> -> vector<8x128xf32>
    %c296 = arith.constant 296 : index
    %c0_10 = arith.constant 0 : index
    %12 = vector.load %arg2[%c296, %c0_10] : memref<328x128xf32, #tpu.memory_space<vmem>>, vector<8x128xf32>
    %13 = arith.addf %11, %12 : vector<8x128xf32>
    %14 = math.tanh %13 : vector<8x128xf32>
    %c160 = arith.constant 160 : index
    %c0_11 = arith.constant 0 : index
    %15 = vector.load %arg2[%c160, %c0_11] : memref<328x128xf32, #tpu.memory_space<vmem>>, vector<128x128xf32>
    %cst_12 = arith.constant dense<0.000000e+00> : vector<8x128xf32>
    %16 = tpu.matmul %14, %15, %cst_12 {dimension_numbers = #tpu.dot_dimension_numbers<[1], [0], [0], [1], [0, 0, 1, 1], [], []>} : vector<8x128xf32>, vector<128x128xf32>, vector<8x128xf32> -> vector<8x128xf32>
    %c304 = arith.constant 304 : index
    %c0_13 = arith.constant 0 : index
    %17 = vector.load %arg2[%c304, %c0_13] : memref<328x128xf32, #tpu.memory_space<vmem>>, vector<8x128xf32>
    %18 = arith.addf %16, %17 : vector<8x128xf32>
    %19 = math.tanh %18 : vector<8x128xf32>
    %c312 = arith.constant 312 : index
    %c0_14 = arith.constant 0 : index
    %20 = vector.load %arg2[%c312, %c0_14] : memref<328x128xf32, #tpu.memory_space<vmem>>, vector<8x128xf32>
    %21 = arith.mulf %19, %20 : vector<8x128xf32>
    %cst_15 = arith.constant dense<0.000000e+00> : vector<8xf32>
    %22 = vector.multi_reduction <add>, %21, %cst_15 [1] : vector<8x128xf32> to vector<8xf32>
    %23 = vector.shape_cast %22 : vector<8xf32> to vector<8x1xf32>
    %24 = tpu.iota {dimensions = array<i32: 1>} : vector<8x128xi32>
    %c64_i32 = arith.constant 64 : i32
    %25 = vector.broadcast %c64_i32 : i32 to vector<8x128xi32>
    %26 = arith.cmpi slt, %24, %25 : vector<8x128xi32>
    %27 = vector.shape_cast %23 : vector<8x1xf32> to vector<8x1xf32>
    %28 = vector.broadcast %27 : vector<8x1xf32> to vector<8x128xf32>
    %29 = arith.select %26, %19, %28 : vector<8x128xi1>, vector<8x128xf32>
    %c320 = arith.constant 320 : index
    %c0_16 = arith.constant 0 : index
    %30 = vector.load %arg2[%c320, %c0_16] : memref<328x128xf32, #tpu.memory_space<vmem>>, vector<8x128xf32>
    %31 = arith.addf %29, %30 : vector<8x128xf32>
    %c0_17 = arith.constant 0 : index
    %c0_18 = arith.constant 0 : index
    %32 = vector.load %arg3[%c0_17, %c0_18] : memref<8x128xf32, #tpu.memory_space<vmem>>, vector<8x128xf32>
    tpu.vector_store %arg3[%c0_17, %c0_18], %31 {strides = array<i32>} : memref<8x128xf32, #tpu.memory_space<vmem>>, vector<8x128xf32>,
    return
  }
}

</mosaic_0001>

<llo_original>
// kernel: tpu_custom_call.1
$region0: #{tpu_custom_call.1}
  #allocation0 [shape = 'u32[]', space=smem, size = 0x4, offset = 0x4, fixed_abs, tag = 'smem constant byte address 0x4 - core index']
  #allocation1 [shape = 'u32[72,128]{1,0:T(1,128)}', space=vmem, size = 0x9000, scoped, tag = 'internal scratch']
  %s0 = inlined_call_operand.hbm [shape: f32[8,16], index: 0, kind: input, shape index: {}]
  %s1 = inlined_call_operand.hbm [shape: f32[8,12], index: 1, kind: input, shape index: {}]
  %s2 = inlined_call_operand.hbm [shape: f32[328,128], index: 2, kind: input, shape index: {}]
  %s3 = inlined_call_operand.hbm [shape: f32[8,128], index: 3, kind: output, shape index: {}]
  %s4 = sld [smem:[#allocation0]]
  $region34: #{tpu_custom_call.1} parent=0
    _
  %s6 = ssub.s32 1, %s4
  %s7 = scalar_select 0, %s6, %s4
  $region1: #{tpu_custom_call.1} parent=0
    #allocation2 [shape = 'u8[4096]{0}', space=vmem, size = 0x1000, scoped, tag = 'input window, operand 0, single buffered']
    #allocation3 [shape = 's32[1]{0}', space=sflag, size = 0x4, scoped, tag = 'scoped memory for tpu_custom_call.1']
    #allocation4 [shape = 's32[1]{0}', space=sflag, size = 0x4, scoped, tag = 'scoped memory for tpu_custom_call.1']
    #allocation5 [shape = 'u8[4096]{0}', space=vmem, size = 0x1000, scoped, tag = 'input window, operand 1, single buffered']
    #allocation6 [shape = 's32[1]{0}', space=sflag, size = 0x4, scoped, tag = 'scoped memory for tpu_custom_call.1']
    #allocation7 [shape = 'u8[167936]{0}', space=vmem, size = 0x29000, scoped, tag = 'input window, operand 2, single buffered']
    #allocation8 [shape = 'u8[4096]{0}', space=vmem, size = 0x1000, scoped, tag = 'output window, operand 0, single buffered']
    %8 = vsyncpa [#allocation3], 0
    %9 = vsyncpa [#allocation6], 0
    %10 = vsyncpa [#allocation4], 0
    // Predicated region
    $region2: #{tpu_custom_call.1} parent=1 // pred_check
      _
    $region3: #{tpu_custom_call.1} parent=1 // pred_check_branch
      %12 = sbr.rel (0) target = $region5
    $region4: #{tpu_custom_call.1} parent=1 // pred_region
      %14 = vsyncadd [#allocation3], 0
      %s16 = sshll.u32 %s0, 4
      %s17 = int_to_ptr.hbm [resolvable:$true] %s16
      %s18 = sshll.u32 [#allocation2], 4
      %s19 = int_to_ptr.vmem [resolvable:$true] %s18
      %21 = dma.hbm_to_vmem [thread:$0]  %s17, 128, %s19, [#allocation3]
    $region5: #{tpu_custom_call.1} parent=1 // pred_fallthru
      _
    // Predicated region
    $region6: #{tpu_custom_call.1} parent=1 // pred_check
      _
    $region7: #{tpu_custom_call.1} parent=1 // pred_check_branch
      %23 = sbr.rel (0) target = $region9
    $region8: #{tpu_custom_call.1} parent=1 // pred_region
      %25 = vsyncadd [#allocation6], 0
      %s27 = sshll.u32 %s1, 4
      %s28 = int_to_ptr.hbm [resolvable:$true] %s27
      %s29 = sshll.u32 [#allocation5], 4
      %s30 = int_to_ptr.vmem [resolvable:$true] %s29
      %32 = dma.hbm_to_vmem [thread:$0]  %s28, 128, %s30, [#allocation6]
    $region9: #{tpu_custom_call.1} parent=1 // pred_fallthru
      _
    // Predicated region
    $region10: #{tpu_custom_call.1} parent=1 // pred_check
      _
    $region11: #{tpu_custom_call.1} parent=1 // pred_check_branch
      %34 = sbr.rel (0) target = $region13
    $region12: #{tpu_custom_call.1} parent=1 // pred_region
      %36 = vsyncadd [#allocation6], 0
      %s37 = sshll.u32 %s2, 4
      %s38 = int_to_ptr.hbm [resolvable:$true] %s37
      %s39 = sshll.u32 [#allocation7], 4
      %s40 = int_to_ptr.vmem [resolvable:$true] %s39
      %45 = dma.hbm_to_vmem [thread:$0]  %s38, 5248, %s40, [#allocation6], 128, 128, 8
    $region13: #{tpu_custom_call.1} parent=1 // pred_fallthru
      _
    // Predicated region
    $region14: #{tpu_custom_call.1} parent=1 // pred_check
      _
    $region15: #{tpu_custom_call.1} parent=1 // pred_check_branch
      %47 = sbr.rel (0) target = $region17
    $region16: #{tpu_custom_call.1} parent=1 // pred_region
      %49 = dma.done [#allocation3], 128
    $region17: #{tpu_custom_call.1} parent=1 // pred_fallthru
      _
    // Predicated region
    $region18: #{tpu_custom_call.1} parent=1 // pred_check
      _
    $region19: #{tpu_custom_call.1} parent=1 // pred_check_branch
      %51 = sbr.rel (0) target = $region21
    $region20: #{tpu_custom_call.1} parent=1 // pred_region
      %53 = dma.done [#allocation6], 128
    $region21: #{tpu_custom_call.1} parent=1 // pred_fallthru
      _
    // Predicated region
    $region22: #{tpu_custom_call.1} parent=1 // pred_check
      _
    $region23: #{tpu_custom_call.1} parent=1 // pred_check_branch
      %55 = sbr.rel (0) target = $region25
    $region24: #{tpu_custom_call.1} parent=1 // pred_region
      %57 = dma.done [#allocation6], 5248
    $region25: #{tpu_custom_call.1} parent=1 // pred_fallthru
      _
    %v58 = vld [vmem:[#allocation2] sm:$0xff]
    %v59 = vld [vmem:[#allocation7] sm:$0xff]
    %v60 = vld [vmem:[#allocation7 + $0x8] sm:$0xff]
    %v61 = vld [vmem:[#allocation5] sm:$0xff]
    %v62 = vld [vmem:[#allocation7 + $0x10] sm:$0xff]
    %v63 = vld [vmem:[#allocation7 + $0x18] sm:$0xf]
    %vm64 = vcmask 97280
    %v66 = vsel %vm64, %v61, 0
    %vm68 = vcmask 1043456
    %v70 = vsel %vm68, %v63, 0
    %72 = vmatpush.msra.mxu0 0.0
    %73 = vmatpush.msra.mxu0 0.0
    %74 = vmatpush.msra.mxu0 0.0
    %75 = vmatpush.msra.mxu0 0.0
    %76 = vmatpush.msra.mxu0 0.0
    %77 = vmatpush.msra.mxu0 0.0
    %78 = vmatpush.msra.mxu0 0.0
    %79 = vmatpush.msra.mxu0 0.0
    %80 = vmatpush.msra.mxu0 0.0
    %81 = vmatpush.msra.mxu0 0.0
    %82 = vmatpush.msra.mxu0 0.0
    %83 = vmatpush.msra.mxu0 0.0
    %84 = vmatpush.msra.mxu0 0.0
    %85 = vmatpush.msra.mxu0 0.0
    %86 = vmatpush.msra.mxu0 %v70
    %87 = vmatpush.msra.mxu0 %v62
    %88 = vmatmul.f32.gmra.mxu0 %v66
    %v89 = vpop.f32.mrf.mxu0
    %v90 = vadd.f32 0.0, %v89
    %91 = vdwg.mxu0
    %vm92 = vcmask 130048
    %v94 = vsel %vm92, %v58, 0
    %96 = vmatpush.msra.mxu0 0.0
    %97 = vmatpush.msra.mxu0 0.0
    %98 = vmatpush.msra.mxu0 0.0
    %99 = vmatpush.msra.mxu0 0.0
    %100 = vmatpush.msra.mxu0 0.0
    %101 = vmatpush.msra.mxu0 0.0
    %102 = vmatpush.msra.mxu0 0.0
    %103 = vmatpush.msra.mxu0 0.0
    %104 = vmatpush.msra.mxu0 0.0
    %105 = vmatpush.msra.mxu0 0.0
    %106 = vmatpush.msra.mxu0 0.0
    %107 = vmatpush.msra.mxu0 0.0
    %108 = vmatpush.msra.mxu0 0.0
    %109 = vmatpush.msra.mxu0 0.0
    %110 = vmatpush.msra.mxu0 %v60
    %111 = vmatpush.msra.mxu0 %v59
    %112 = vmatmul.f32.gmra.mxu0 %v94
    %v113 = vpop.f32.mrf.mxu0
    %v114 = vadd.f32 %v90, %v113
    %115 = vdwg.mxu0
    %v116 = vld [vmem:[#allocation7 + $0x120] sm:$0xff]
    %v117 = vadd.f32 %v114, %v116
    %v118 = vtanh.pop %v117
    %v119 = vld [vmem:[#allocation7 + $0x20] sm:$0xff]
    %v120 = vld [vmem:[#allocation7 + $0x28] sm:$0xff]
    %v121 = vld [vmem:[#allocation7 + $0x30] sm:$0xff]
    %v122 = vld [vmem:[#allocation7 + $0x38] sm:$0xff]
    %v123 = vld [vmem:[#allocation7 + $0x40] sm:$0xff]
    %v124 = vld [vmem:[#allocation7 + $0x48] sm:$0xff]
    %v125 = vld [vmem:[#allocation7 + $0x50] sm:$0xff]
    %v126 = vld [vmem:[#allocation7 + $0x58] sm:$0xff]
    %v127 = vld [vmem:[#allocation7 + $0x60] sm:$0xff]
    %v128 = vld [vmem:[#allocation7 + $0x68] sm:$0xff]
    %v129 = vld [vmem:[#allocation7 + $0x70] sm:$0xff]
    %v130 = vld [vmem:[#allocation7 + $0x78] sm:$0xff]
    %v131 = vld [vmem:[#allocation7 + $0x80] sm:$0xff]
    %v132 = vld [vmem:[#allocation7 + $0x88] sm:$0xff]
    %v133 = vld [vmem:[#allocation7 + $0x90] sm:$0xff]
    %v134 = vld [vmem:[#allocation7 + $0x98] sm:$0xff]
    %v135 = vld [vmem:[#allocation7 + $0x128] sm:$0xff]
    %136 = vmatpush.msra.mxu0 %v134
    %137 = vmatpush.msra.mxu0 %v133
    %138 = vmatpush.msra.mxu0 %v132
    %139 = vmatpush.msra.mxu0 %v131
    %140 = vmatpush.msra.mxu0 %v130
    %141 = vmatpush.msra.mxu0 %v129
    %142 = vmatpush.msra.mxu0 %v128
    %143 = vmatpush.msra.mxu0 %v127
    %144 = vmatpush.msra.mxu0 %v126
    %145 = vmatpush.msra.mxu0 %v125
    %146 = vmatpush.msra.mxu0 %v124
    %147 = vmatpush.msra.mxu0 %v123
    %148 = vmatpush.msra.mxu0 %v122
    %149 = vmatpush.msra.mxu0 %v121
    %150 = vmatpush.msra.mxu0 %v120
    %151 = vmatpush.msra.mxu0 %v119
    %152 = vmatmul.f32.gmra.mxu0 %v118
    %v153 = vpop.f32.mrf.mxu0
    %v154 = vadd.f32 %v135, %v153
    %155 = vdwg.mxu0
    %v156 = vtanh.pop %v154
    %v157 = vld [vmem:[#allocation7 + $0xa0] sm:$0xff]
    %v158 = vld [vmem:[#allocation7 + $0xa8] sm:$0xff]
    %v159 = vld [vmem:[#allocation7 + $0xb0] sm:$0xff]
    %v160 = vld [vmem:[#allocation7 + $0xb8] sm:$0xff]
    %v161 = vld [vmem:[#allocation7 + $0xc0] sm:$0xff]
    %v162 = vld [vmem:[#allocation7 + $0xc8] sm:$0xff]
    %v163 = vld [vmem:[#allocation7 + $0xd0] sm:$0xff]
    %v164 = vld [vmem:[#allocation7 + $0xd8] sm:$0xff]
    %v165 = vld [vmem:[#allocation7 + $0xe0] sm:$0xff]
    %v166 = vld [vmem:[#allocation7 + $0xe8] sm:$0xff]
    %v167 = vld [vmem:[#allocation7 + $0xf0] sm:$0xff]
    %v168 = vld [vmem:[#allocation7 + $0xf8] sm:$0xff]
    %v169 = vld [vmem:[#allocation7 + $0x100] sm:$0xff]
    %v170 = vld [vmem:[#allocation7 + $0x108] sm:$0xff]
    %v171 = vld [vmem:[#allocation7 + $0x110] sm:$0xff]
    %v172 = vld [vmem:[#allocation7 + $0x118] sm:$0xff]
    %v173 = vld [vmem:[#allocation7 + $0x130] sm:$0xff]
    %174 = vmatpush.msra.mxu0 %v172
    %175 = vmatpush.msra.mxu0 %v171
    %176 = vmatpush.msra.mxu0 %v170
    %177 = vmatpush.msra.mxu0 %v169
    %178 = vmatpush.msra.mxu0 %v168
    %179 = vmatpush.msra.mxu0 %v167
    %180 = vmatpush.msra.mxu0 %v166
    %181 = vmatpush.msra.mxu0 %v165
    %182 = vmatpush.msra.mxu0 %v164
    %183 = vmatpush.msra.mxu0 %v163
    %184 = vmatpush.msra.mxu0 %v162
    %185 = vmatpush.msra.mxu0 %v161
    %186 = vmatpush.msra.mxu0 %v160
    %187 = vmatpush.msra.mxu0 %v159
    %188 = vmatpush.msra.mxu0 %v158
    %189 = vmatpush.msra.mxu0 %v157
    %190 = vmatmul.f32.gmra.mxu0 %v156
    %v191 = vpop.f32.mrf.mxu0
    %v192 = vadd.f32 %v173, %v191
    %193 = vdwg.mxu0
    %v194 = vtanh.pop %v192
    %v195 = vld [vmem:[#allocation7 + $0x138] sm:$0xff]
    %v196 = vmul.f32 %v194, %v195
    %197 = vadd.xlane.f32.xlu0 %v196
    %v198 = vpop.xlane.xlu0 %197
    %v199 = vlaneseq
    %v200 = vand.u32 %v199, 127
    %vm201 = vcmp.lt.s32.totalorder %v200, 64
    %v202 = vsel %vm201, %v194, %v198
    %v203 = vld [vmem:[#allocation7 + $0x140] sm:$0xff]
    %v204 = vadd.f32 %v202, %v203
    %205 = vst [vmem:[#allocation8] sm:$0xff] %v204
    // Predicated region
    $region26: #{tpu_custom_call.1} parent=1 // pred_check
      _
    $region27: #{tpu_custom_call.1} parent=1 // pred_check_branch
      %207 = sbr.rel (0) target = $region29
    $region28: #{tpu_custom_call.1} parent=1 // pred_region
      %209 = vsyncadd [#allocation4], 0
      %s211 = sshll.u32 [#allocation8], 4
      %s212 = int_to_ptr.vmem [resolvable:$true] %s211
      %s213 = sshll.u32 %s3, 4
      %s214 = int_to_ptr.hbm [resolvable:$true] %s213
      %216 = dma.vmem_to_hbm [thread:$0]  %s212, 128, %s214, [#allocation4]
    $region29: #{tpu_custom_call.1} parent=1 // pred_fallthru
      _
    // Predicated region
    $region30: #{tpu_custom_call.1} parent=1 // pred_check
      _
    $region31: #{tpu_custom_call.1} parent=1 // pred_check_branch
      %218 = sbr.rel (0) target = $region33
    $region32: #{tpu_custom_call.1} parent=1 // pred_region
      %220 = dma.done [#allocation4], 128
    $region33: #{tpu_custom_call.1} parent=1 // pred_fallthru
      _
    %221 = vsyncpa [#allocation3], 1
    %222 = vsyncpa [#allocation6], 1
    %223 = vsyncpa [#allocation4], 1

</llo_original>
